<compile_context>
chip_gen: v7x
topology: tpu7x:2x2x1
jax: 0.10.0
libtpu: 0.0.40
codegen_flags: <defaults>
</compile_context>

<pallas_src>
import math

import jax
import jax.numpy as jnp
from jax.experimental import pallas as pl
from jax.experimental.pallas import tpu as pltpu

# ---------------- model dims (small, consistent with the module) -------------
SEQ = 8          # seq_len
BATCH = 2        # batch
EMBED = 32       # decoder_embed_dim
NHEADS = 4       # decoder_attention_heads
HEAD_DIM = EMBED // NHEADS
FFN = 128        # decoder_ffn_embed_dim
EPS = 1e-5

VEC_LANES = max(EMBED, FFN, 128)   # lane width of the packed vector slab

# rows of the packed (10, VEC_LANES) vector slab
ROW_LN1_W, ROW_LN1_B = 0, 1
ROW_BQ, ROW_BK, ROW_BV = 2, 3, 4
ROW_BOUT = 5
ROW_LN2_W, ROW_LN2_B = 6, 7
ROW_BFC1, ROW_BFC2 = 8, 9
NUM_VEC_ROWS = 10


# ----------------------------- in-kernel helpers ------------------------------
def _div_const(x_i32, d):
    """Vector i32 floor-div by a positive compile-time constant (no int div)."""
    if d == 1:
        return x_i32
    if (d & (d - 1)) == 0:                       # power of two -> shift
        return jnp.right_shift(x_i32, int(d).bit_length() - 1)
    # exact for the small non-negative magnitudes used here
    return jnp.floor(x_i32.astype(jnp.float32) / float(d)).astype(jnp.int32)


def _mod_const(x_i32, d):
    """Vector i32 remainder by a positive compile-time constant."""
    if d == 1:
        return jnp.zeros_like(x_i32)
    if (d & (d - 1)) == 0:                       # power of two -> mask
        return jnp.bitwise_and(x_i32, d - 1)
    return x_i32 - _div_const(x_i32, d) * d


def _vrow(vec_ref, row, width):
    """Static (1, width) slice of the packed vector slab."""
    return vec_ref[row:row + 1, :width]


# ------------------------------- Pallas kernel -------------------------------
def _decoder_layer_kernel(x_ref, wattn_ref, wfc1_ref, wfc2_ref, vec_ref, o_ref):
    x = x_ref[...]                               # (T, E), token t = s*B + b
    T = x.shape[0]
    E = EMBED
    HT = NHEADS * T

    ln1_w = _vrow(vec_ref, ROW_LN1_W, E)
    ln1_b = _vrow(vec_ref, ROW_LN1_B, E)
    bq = _vrow(vec_ref, ROW_BQ, E)
    bk = _vrow(vec_ref, ROW_BK, E)
    bv = _vrow(vec_ref, ROW_BV, E)
    bout = _vrow(vec_ref, ROW_BOUT, E)
    ln2_w = _vrow(vec_ref, ROW_LN2_W, E)
    ln2_b = _vrow(vec_ref, ROW_LN2_B, E)
    bfc1 = _vrow(vec_ref, ROW_BFC1, FFN)
    bfc2 = _vrow(vec_ref, ROW_BFC2, E)

    def layer_norm(h, w, b):
        mu = jnp.mean(h, axis=-1, keepdims=True)
        var = jnp.mean(jnp.square(h - mu), axis=-1, keepdims=True)
        return (h - mu) * jax.lax.rsqrt(var + EPS) * w + b

    # ---- self-attention block (pre-norm) ----
    residual = x
    h = layer_norm(x, ln1_w, ln1_b)

    wq = wattn_ref[:, 0 * E:1 * E]
    wk = wattn_ref[:, 1 * E:2 * E]
    wv = wattn_ref[:, 2 * E:3 * E]
    wout = wattn_ref[:, 3 * E:4 * E]

    q = jnp.dot(h, wq, preferred_element_type=jnp.float32) + bq
    k = jnp.dot(h, wk, preferred_element_type=jnp.float32) + bk
    v = jnp.dot(h, wv, preferred_element_type=jnp.float32) + bv
    q = q * (1.0 / math.sqrt(HEAD_DIM))

    # ---- masks generated in-kernel (no extra HBM->VMEM inputs) ----
    # additive mask (T, H*T): causal within a sequence, -1e9 across batches.
    row_i = jax.lax.broadcasted_iota(jnp.int32, (T, HT), 0)      # query token
    col_c = jax.lax.broadcasted_iota(jnp.int32, (T, HT), 1)      # (head, key)
    s_q = _div_const(row_i, BATCH)
    b_q = _mod_const(row_i, BATCH)
    key_tok = _mod_const(col_c, T)
    s_k = _div_const(key_tok, BATCH)
    b_k = _mod_const(key_tok, BATCH)
    visible = jnp.logical_and(b_q == b_k, s_k <= s_q)
    amask = jnp.where(visible, jnp.float32(0.0), jnp.float32(-1e9))

    # head mask (H*T, E): row block h selects head-h embedding columns.
    hr = jax.lax.broadcasted_iota(jnp.int32, (HT, E), 0)
    hc = jax.lax.broadcasted_iota(jnp.int32, (HT, E), 1)
    hmask = (_div_const(hr, T) == _div_const(hc, HEAD_DIM)).astype(jnp.float32)

    # Block-diagonal fused multi-head attention:
    #   k_bd[(h, j), :] = k[j, :] restricted to head-h columns  -> (H*T, E)
    k_bd = jnp.tile(k, (NHEADS, 1)) * hmask
    v_bd = jnp.tile(v, (NHEADS, 1)) * hmask

    # scores[i, (h, j)] = q_h[i] . k_h[j]  -- one NT matmul, no per-head loop
    s = jax.lax.dot_general(q, k_bd, (((1,), (1,)), ((), ())),
                            preferred_element_type=jnp.float32)      # (T, H*T)
    s = s + amask
    s = s - jnp.max(s, axis=-1, keepdims=True)   # row-global shift, valid per head
    p = jnp.exp(s)

    # per-head denominators broadcast straight onto that head's output columns
    denom = jnp.dot(p, hmask, preferred_element_type=jnp.float32)    # (T, E)
    o_heads = jnp.dot(p, v_bd, preferred_element_type=jnp.float32)   # (T, E)
    attn = o_heads / denom                        # exact division (tight tol)

    attn_out = jnp.dot(attn, wout, preferred_element_type=jnp.float32) + bout
    x1 = attn_out + residual

    # ---- feed-forward block (pre-norm) ----
    residual2 = x1
    h2 = layer_norm(x1, ln2_w, ln2_b)
    f1 = jnp.dot(h2, wfc1_ref[...], preferred_element_type=jnp.float32) + bfc1
    f1 = jnp.maximum(f1, 0.0)                                         # relu
    f2 = jnp.dot(f1, wfc2_ref[...], preferred_element_type=jnp.float32) + bfc2

    o_ref[...] = residual2 + f2


# ------------------------------- wrapper --------------------------------------
@jax.jit
def decoder_layer_forward(x_sbe, packed_params):
    """x_sbe: (seq, batch, embed) float32. Returns same shape."""
    S, B, E = x_sbe.shape
    T = S * B
    w_attn, wfc1_t, wfc2_t, vec_slab = packed_params

    # (S, B, E) -> (S*B, E): merge leading dims only -- no transpose in HBM.
    x2d = x_sbe.reshape(T, E)

    out2d = pl.pallas_call(
        _decoder_layer_kernel,
        out_shape=jax.ShapeDtypeStruct((T, E), jnp.float32),
        in_specs=[pl.BlockSpec(memory_space=pltpu.MemorySpace.VMEM)] * 5,
        out_specs=pl.BlockSpec(memory_space=pltpu.MemorySpace.VMEM),
    )(x2d, w_attn, wfc1_t, wfc2_t, vec_slab)

    return out2d.reshape(S, B, E)


# ----------------------- deterministic parameter init -------------------------
def _kaiming_uniform(key, out_dim, in_dim):
    # kaiming_uniform_(a=sqrt(5)) -> U(-1/sqrt(fan_in), 1/sqrt(fan_in))
    bound = 1.0 / math.sqrt(in_dim)
    return jax.random.uniform(key, (out_dim, in_dim), jnp.float32, -bound, bound)


def _bias_uniform(key, dim, fan_in):
    bound = 1.0 / math.sqrt(fan_in)
    return jax.random.uniform(key, (dim,), jnp.float32, -bound, bound)


def init_raw_params(key):
    """Raw torch-layout parameters (used by the pure-JAX reference)."""
    ks = jax.random.split(key, 8)
    ln1_w = jnp.ones((EMBED,), jnp.float32)
    ln1_b = jnp.zeros((EMBED,), jnp.float32)
    ln2_w = jnp.ones((EMBED,), jnp.float32)
    ln2_b = jnp.zeros((EMBED,), jnp.float32)

    wqkv = _kaiming_uniform(ks[0], 3 * EMBED, EMBED)      # (3E, E) torch layout
    bqkv = _bias_uniform(ks[1], 3 * EMBED, EMBED)
    wout = _kaiming_uniform(ks[2], EMBED, EMBED)
    bout = _bias_uniform(ks[3], EMBED, EMBED)
    wfc1 = _kaiming_uniform(ks[4], FFN, EMBED)
    bfc1 = _bias_uniform(ks[5], FFN, EMBED)
    wfc2 = _kaiming_uniform(ks[6], EMBED, FFN)
    bfc2 = _bias_uniform(ks[7], EMBED, FFN)

    return (ln1_w, ln1_b, wqkv, bqkv, wout, bout,
            ln2_w, ln2_b, wfc1, bfc1, wfc2, bfc2)


def _pack_vec_slab(vectors):
    rows = []
    for v in vectors:
        v = jnp.asarray(v, jnp.float32).reshape(-1)
        rows.append(jnp.pad(v, (0, VEC_LANES - v.shape[0])))
    return jnp.stack(rows, axis=0)                         # (NUM_VEC_ROWS, 128)


def pack_params(raw):
    """Free layout plumbing: 4 slabs total instead of 16 tiny refs."""
    (ln1_w, ln1_b, wqkv, bqkv, wout, bout,
     ln2_w, ln2_b, wfc1, bfc1, wfc2, bfc2) = raw
    E = EMBED
    w_attn = jnp.concatenate([wqkv.T, wout.T], axis=1)     # (E, 4E) = (32, 128)
    wfc1_t = wfc1.T                                        # (E, FFN) = (32, 128)
    wfc2_t = wfc2.T                                        # (FFN, E) = (128, 32)
    bq, bk, bv = bqkv[:E], bqkv[E:2 * E], bqkv[2 * E:]
    vec_slab = _pack_vec_slab([ln1_w, ln1_b, bq, bk, bv, bout,
                               ln2_w, ln2_b, bfc1, bfc2])  # (10, 128)
    return (w_attn, wfc1_t, wfc2_t, vec_slab)


# ------------------------------ pure-JAX reference ----------------------------
def reference_forward(x_sbe, raw):
    (ln1_w, ln1_b, wqkv, bqkv, wout, bout,
     ln2_w, ln2_b, wfc1, bfc1, wfc2, bfc2) = raw
    S, B, E = x_sbe.shape
    H, D = NHEADS, HEAD_DIM

    def ln(h, w, b):
        mu = jnp.mean(h, axis=-1, keepdims=True)
        var = jnp.mean(jnp.square(h - mu), axis=-1, keepdims=True)
        return (h - mu) / jnp.sqrt(var + EPS) * w + b

    causal = jnp.where(jnp.arange(S)[None, :] > jnp.arange(S)[:, None],
                       jnp.float32(-1e9), jnp.float32(0.0))

    residual = x_sbe
    h = ln(x_sbe, ln1_w, ln1_b)
    qkv = jnp.einsum('sbe,fe->sbf', h, wqkv) + bqkv
    q, k, v = qkv[..., :E], qkv[..., E:2 * E], qkv[..., 2 * E:]

    def heads(t):  # (S,B,E) -> (B,H,S,D)
        return jnp.transpose(t.reshape(S, B, H, D), (1, 2, 0, 3))

    qh, kh, vh = heads(q), heads(k), heads(v)
    s = jnp.einsum('bhqd,bhkd->bhqk', qh, kh) / math.sqrt(D) + causal
    p = jax.nn.softmax(s, axis=-1)
    a = jnp.einsum('bhqk,bhkd->bhqd', p, vh)               # (B,H,S,D)
    a = jnp.transpose(a, (2, 0, 1, 3)).reshape(S, B, E)
    x1 = jnp.einsum('sbe,fe->sbf', a, wout) + bout + residual

    h2 = ln(x1, ln2_w, ln2_b)
    f1 = jnp.maximum(jnp.einsum('sbe,fe->sbf', h2, wfc1) + bfc1, 0.0)
    f2 = jnp.einsum('sbf,ef->sbe', f1, wfc2) + bfc2
    return x1 + f2


# ------------------------------------ main ------------------------------------
if __name__ == "__main__":
    key = jax.random.PRNGKey(0)
    kx, kp = jax.random.split(key)

    x = jax.random.normal(kx, (SEQ, BATCH, EMBED), jnp.float32)
    raw = init_raw_params(kp)
    packed = pack_params(raw)

    out = decoder_layer_forward(x, packed)
    out = jax.block_until_ready(out)

    ref = reference_forward(x, raw)
    assert out.shape == (SEQ, BATCH, EMBED)
    assert jnp.allclose(out, ref, rtol=1e-4, atol=1e-4), "mismatch vs reference"

    print("KERNEL_OK")
</pallas_src>

<mosaic_0001>
module attributes {stable_mosaic.version = 11 : i64} {
  func.func @_decoder_layer_kernel(%arg0: memref<16x32xf32, #tpu.memory_space<vmem>>, %arg1: memref<32x128xf32, #tpu.memory_space<vmem>>, %arg2: memref<32x128xf32, #tpu.memory_space<vmem>>, %arg3: memref<128x32xf32, #tpu.memory_space<vmem>>, %arg4: memref<10x128xf32, #tpu.memory_space<vmem>>, %arg5: memref<16x32xf32, #tpu.memory_space<vmem>>) attributes {dimension_semantics = [], scalar_prefetch = 0 : i64, scratch_operands = 0 : i64, tpu.core_type = #tpu.core_type<tc>} {
    %c0 = arith.constant 0 : index
    %c0_0 = arith.constant 0 : index
    %0 = vector.load %arg0[%c0, %c0_0] : memref<16x32xf32, #tpu.memory_space<vmem>>, vector<16x32xf32>
    %c0_1 = arith.constant 0 : index
    %c0_2 = arith.constant 0 : index
    %1 = vector.load %arg4[%c0_1, %c0_2] : memref<10x128xf32, #tpu.memory_space<vmem>>, vector<1x32xf32>
    %c1 = arith.constant 1 : index
    %c0_3 = arith.constant 0 : index
    %2 = vector.load %arg4[%c1, %c0_3] : memref<10x128xf32, #tpu.memory_space<vmem>>, vector<1x32xf32>
    %c2 = arith.constant 2 : index
    %c0_4 = arith.constant 0 : index
    %3 = vector.load %arg4[%c2, %c0_4] : memref<10x128xf32, #tpu.memory_space<vmem>>, vector<1x32xf32>
    %c3 = arith.constant 3 : index
    %c0_5 = arith.constant 0 : index
    %4 = vector.load %arg4[%c3, %c0_5] : memref<10x128xf32, #tpu.memory_space<vmem>>, vector<1x32xf32>
    %c4 = arith.constant 4 : index
    %c0_6 = arith.constant 0 : index
    %5 = vector.load %arg4[%c4, %c0_6] : memref<10x128xf32, #tpu.memory_space<vmem>>, vector<1x32xf32>
    %c5 = arith.constant 5 : index
    %c0_7 = arith.constant 0 : index
    %6 = vector.load %arg4[%c5, %c0_7] : memref<10x128xf32, #tpu.memory_space<vmem>>, vector<1x32xf32>
    %c6 = arith.constant 6 : index
    %c0_8 = arith.constant 0 : index
    %7 = vector.load %arg4[%c6, %c0_8] : memref<10x128xf32, #tpu.memory_space<vmem>>, vector<1x32xf32>
    %c7 = arith.constant 7 : index
    %c0_9 = arith.constant 0 : index
    %8 = vector.load %arg4[%c7, %c0_9] : memref<10x128xf32, #tpu.memory_space<vmem>>, vector<1x32xf32>
    %c8 = arith.constant 8 : index
    %c0_10 = arith.constant 0 : index
    %9 = vector.load %arg4[%c8, %c0_10] : memref<10x128xf32, #tpu.memory_space<vmem>>, vector<1x128xf32>
    %c9 = arith.constant 9 : index
    %c0_11 = arith.constant 0 : index
    %10 = vector.load %arg4[%c9, %c0_11] : memref<10x128xf32, #tpu.memory_space<vmem>>, vector<1x32xf32>
    %cst = arith.constant dense<0.000000e+00> : vector<16xf32>
    %11 = vector.multi_reduction <add>, %0, %cst [1] : vector<16x32xf32> to vector<16xf32>
    %12 = vector.shape_cast %11 : vector<16xf32> to vector<16x1xf32>
    %cst_12 = arith.constant 3.200000e+01 : f32
    %13 = vector.broadcast %cst_12 : f32 to vector<16x1xf32>
    %14 = arith.divf %12, %13 : vector<16x1xf32>
    %15 = vector.broadcast %14 : vector<16x1xf32> to vector<16x32xf32>
    %16 = arith.subf %0, %15 : vector<16x32xf32>
    %17 = arith.mulf %16, %16 : vector<16x32xf32>
    %cst_13 = arith.constant dense<0.000000e+00> : vector<16xf32>
    %18 = vector.multi_reduction <add>, %17, %cst_13 [1] : vector<16x32xf32> to vector<16xf32>
    %19 = vector.shape_cast %18 : vector<16xf32> to vector<16x1xf32>
    %cst_14 = arith.constant 3.200000e+01 : f32
    %20 = vector.broadcast %cst_14 : f32 to vector<16x1xf32>
    %21 = arith.divf %19, %20 : vector<16x1xf32>
    %22 = vector.broadcast %14 : vector<16x1xf32> to vector<16x32xf32>
    %23 = arith.subf %0, %22 : vector<16x32xf32>
    %cst_15 = arith.constant 9.99999974E-6 : f32
    %24 = vector.broadcast %cst_15 : f32 to vector<16x1xf32>
    %25 = arith.addf %21, %24 : vector<16x1xf32>
    %26 = math.rsqrt %25 : vector<16x1xf32>
    %27 = vector.broadcast %26 : vector<16x1xf32> to vector<16x32xf32>
    %28 = arith.mulf %23, %27 : vector<16x32xf32>
    %29 = vector.broadcast %1 : vector<1x32xf32> to vector<16x32xf32>
    %30 = arith.mulf %28, %29 : vector<16x32xf32>
    %31 = vector.broadcast %2 : vector<1x32xf32> to vector<16x32xf32>
    %32 = arith.addf %30, %31 : vector<16x32xf32>
    %c0_16 = arith.constant 0 : index
    %c0_17 = arith.constant 0 : index
    %33 = vector.load %arg1[%c0_16, %c0_17] : memref<32x128xf32, #tpu.memory_space<vmem>>, vector<32x32xf32>
    %c0_18 = arith.constant 0 : index
    %c32 = arith.constant 32 : index
    %34 = vector.load %arg1[%c0_18, %c32] : memref<32x128xf32, #tpu.memory_space<vmem>>, vector<32x32xf32>
    %c0_19 = arith.constant 0 : index
    %c64 = arith.constant 64 : index
    %35 = vector.load %arg1[%c0_19, %c64] : memref<32x128xf32, #tpu.memory_space<vmem>>, vector<32x32xf32>
    %c0_20 = arith.constant 0 : index
    %c96 = arith.constant 96 : index
    %36 = vector.load %arg1[%c0_20, %c96] : memref<32x128xf32, #tpu.memory_space<vmem>>, vector<32x32xf32>
    %cst_21 = arith.constant dense<0.000000e+00> : vector<16x32xf32>
    %37 = tpu.matmul %32, %33, %cst_21 {dimension_numbers = #tpu.dot_dimension_numbers<[1], [0], [0], [1], [0, 0, 1, 1], [], []>} : vector<16x32xf32>, vector<32x32xf32>, vector<16x32xf32> -> vector<16x32xf32>
    %38 = vector.broadcast %3 : vector<1x32xf32> to vector<16x32xf32>
    %39 = arith.addf %37, %38 : vector<16x32xf32>
    %cst_22 = arith.constant dense<0.000000e+00> : vector<16x32xf32>
    %40 = tpu.matmul %32, %34, %cst_22 {dimension_numbers = #tpu.dot_dimension_numbers<[1], [0], [0], [1], [0, 0, 1, 1], [], []>} : vector<16x32xf32>, vector<32x32xf32>, vector<16x32xf32> -> vector<16x32xf32>
    %41 = vector.broadcast %4 : vector<1x32xf32> to vector<16x32xf32>
    %42 = arith.addf %40, %41 : vector<16x32xf32>
    %cst_23 = arith.constant dense<0.000000e+00> : vector<16x32xf32>
    %43 = tpu.matmul %32, %35, %cst_23 {dimension_numbers = #tpu.dot_dimension_numbers<[1], [0], [0], [1], [0, 0, 1, 1], [], []>} : vector<16x32xf32>, vector<32x32xf32>, vector<16x32xf32> -> vector<16x32xf32>
    %44 = vector.broadcast %5 : vector<1x32xf32> to vector<16x32xf32>
    %45 = arith.addf %43, %44 : vector<16x32xf32>
    %cst_24 = arith.constant 0.353553385 : f32
    %46 = vector.broadcast %cst_24 : f32 to vector<16x32xf32>
    %47 = arith.mulf %39, %46 : vector<16x32xf32>
    %48 = tpu.iota {dimensions = array<i32: 0>} : vector<16x64xi32>
    %49 = tpu.iota {dimensions = array<i32: 1>} : vector<16x64xi32>
    %c1_i32 = arith.constant 1 : i32
    %50 = vector.broadcast %c1_i32 : i32 to vector<16x64xi32>
    %51 = arith.shrsi %48, %50 : vector<16x64xi32>
    %c1_i32_25 = arith.constant 1 : i32
    %52 = vector.broadcast %c1_i32_25 : i32 to vector<16x64xi32>
    %53 = arith.andi %48, %52 : vector<16x64xi32>
    %c15_i32 = arith.constant 15 : i32
    %54 = vector.broadcast %c15_i32 : i32 to vector<16x64xi32>
    %55 = arith.andi %49, %54 : vector<16x64xi32>
    %c1_i32_26 = arith.constant 1 : i32
    %56 = vector.broadcast %c1_i32_26 : i32 to vector<16x64xi32>
    %57 = arith.shrsi %55, %56 : vector<16x64xi32>
    %c1_i32_27 = arith.constant 1 : i32
    %58 = vector.broadcast %c1_i32_27 : i32 to vector<16x64xi32>
    %59 = arith.andi %55, %58 : vector<16x64xi32>
    %60 = arith.cmpi eq, %53, %59 : vector<16x64xi32>
    %61 = arith.cmpi sle, %57, %51 : vector<16x64xi32>
    %62 = arith.andi %60, %61 : vector<16x64xi1>
    %cst_28 = arith.constant 0.000000e+00 : f32
    %cst_29 = arith.constant -1.000000e+09 : f32
    %63 = vector.broadcast %cst_28 : f32 to vector<16x64xf32>
    %64 = vector.broadcast %cst_29 : f32 to vector<16x64xf32>
    %65 = arith.select %62, %63, %64 : vector<16x64xi1>, vector<16x64xf32>
    %66 = tpu.iota {dimensions = array<i32: 0>} : vector<64x32xi32>
    %67 = tpu.iota {dimensions = array<i32: 1>} : vector<64x32xi32>
    %c4_i32 = arith.constant 4 : i32
    %68 = vector.broadcast %c4_i32 : i32 to vector<64x32xi32>
    %69 = arith.shrsi %66, %68 : vector<64x32xi32>
    %c3_i32 = arith.constant 3 : i32
    %70 = vector.broadcast %c3_i32 : i32 to vector<64x32xi32>
    %71 = arith.shrsi %67, %70 : vector<64x32xi32>
    %72 = arith.cmpi eq, %69, %71 : vector<64x32xi32>
    %73 = arith.extui %72 : vector<64x32xi1> to vector<64x32xi32>
    %74 = arith.sitofp %73 : vector<64x32xi32> to vector<64x32xf32>
    %75 = tpu.concatenate %42, %42, %42, %42 in 0 : vector<16x32xf32>, vector<16x32xf32>, vector<16x32xf32>, vector<16x32xf32> -> vector<64x32xf32>
    %76 = arith.mulf %75, %74 : vector<64x32xf32>
    %77 = tpu.concatenate %45, %45, %45, %45 in 0 : vector<16x32xf32>, vector<16x32xf32>, vector<16x32xf32>, vector<16x32xf32> -> vector<64x32xf32>
    %78 = arith.mulf %77, %74 : vector<64x32xf32>
    %cst_30 = arith.constant dense<0.000000e+00> : vector<16x64xf32>
    %79 = tpu.matmul %47, %76, %cst_30 {dimension_numbers = #tpu.dot_dimension_numbers<[1], [1], [0], [0], [0, 0, 1, 0], [], []>} : vector<16x32xf32>, vector<64x32xf32>, vector<16x64xf32> -> vector<16x64xf32>
    %80 = arith.addf %79, %65 : vector<16x64xf32>
    %cst_31 = arith.constant dense<0xFF800000> : vector<16xf32>
    %81 = vector.multi_reduction <maximumf>, %80, %cst_31 [1] : vector<16x64xf32> to vector<16xf32>
    %82 = vector.shape_cast %81 : vector<16xf32> to vector<16x1xf32>
    %83 = vector.broadcast %82 : vector<16x1xf32> to vector<16x64xf32>
    %84 = arith.subf %80, %83 : vector<16x64xf32>
    %85 = math.exp %84 : vector<16x64xf32>
    %cst_32 = arith.constant dense<0.000000e+00> : vector<16x32xf32>
    %86 = tpu.matmul %85, %74, %cst_32 {dimension_numbers = #tpu.dot_dimension_numbers<[1], [0], [0], [1], [0, 0, 1, 1], [], []>} : vector<16x64xf32>, vector<64x32xf32>, vector<16x32xf32> -> vector<16x32xf32>
    %cst_33 = arith.constant dense<0.000000e+00> : vector<16x32xf32>
    %87 = tpu.matmul %85, %78, %cst_33 {dimension_numbers = #tpu.dot_dimension_numbers<[1], [0], [0], [1], [0, 0, 1, 1], [], []>} : vector<16x64xf32>, vector<64x32xf32>, vector<16x32xf32> -> vector<16x32xf32>
    %88 = arith.divf %87, %86 : vector<16x32xf32>
    %cst_34 = arith.constant dense<0.000000e+00> : vector<16x32xf32>
    %89 = tpu.matmul %88, %36, %cst_34 {dimension_numbers = #tpu.dot_dimension_numbers<[1], [0], [0], [1], [0, 0, 1, 1], [], []>} : vector<16x32xf32>, vector<32x32xf32>, vector<16x32xf32> -> vector<16x32xf32>
    %90 = vector.broadcast %6 : vector<1x32xf32> to vector<16x32xf32>
    %91 = arith.addf %89, %90 : vector<16x32xf32>
    %92 = arith.addf %91, %0 : vector<16x32xf32>
    %cst_35 = arith.constant dense<0.000000e+00> : vector<16xf32>
    %93 = vector.multi_reduction <add>, %92, %cst_35 [1] : vector<16x32xf32> to vector<16xf32>
    %94 = vector.shape_cast %93 : vector<16xf32> to vector<16x1xf32>
    %cst_36 = arith.constant 3.200000e+01 : f32
    %95 = vector.broadcast %cst_36 : f32 to vector<16x1xf32>
    %96 = arith.divf %94, %95 : vector<16x1xf32>
    %97 = vector.broadcast %96 : vector<16x1xf32> to vector<16x32xf32>
    %98 = arith.subf %92, %97 : vector<16x32xf32>
    %99 = arith.mulf %98, %98 : vector<16x32xf32>
    %cst_37 = arith.constant dense<0.000000e+00> : vector<16xf32>
    %100 = vector.multi_reduction <add>, %99, %cst_37 [1] : vector<16x32xf32> to vector<16xf32>
    %101 = vector.shape_cast %100 : vector<16xf32> to vector<16x1xf32>
    %cst_38 = arith.constant 3.200000e+01 : f32
    %102 = vector.broadcast %cst_38 : f32 to vector<16x1xf32>
    %103 = arith.divf %101, %102 : vector<16x1xf32>
    %104 = vector.broadcast %96 : vector<16x1xf32> to vector<16x32xf32>
    %105 = arith.subf %92, %104 : vector<16x32xf32>
    %cst_39 = arith.constant 9.99999974E-6 : f32
    %106 = vector.broadcast %cst_39 : f32 to vector<16x1xf32>
    %107 = arith.addf %103, %106 : vector<16x1xf32>
    %108 = math.rsqrt %107 : vector<16x1xf32>
    %109 = vector.broadcast %108 : vector<16x1xf32> to vector<16x32xf32>
    %110 = arith.mulf %105, %109 : vector<16x32xf32>
    %111 = vector.broadcast %7 : vector<1x32xf32> to vector<16x32xf32>
    %112 = arith.mulf %110, %111 : vector<16x32xf32>
    %113 = vector.broadcast %8 : vector<1x32xf32> to vector<16x32xf32>
    %114 = arith.addf %112, %113 : vector<16x32xf32>
    %c0_40 = arith.constant 0 : index
    %c0_41 = arith.constant 0 : index
    %115 = vector.load %arg2[%c0_40, %c0_41] : memref<32x128xf32, #tpu.memory_space<vmem>>, vector<32x128xf32>
    %cst_42 = arith.constant dense<0.000000e+00> : vector<16x128xf32>
    %116 = tpu.matmul %114, %115, %cst_42 {dimension_numbers = #tpu.dot_dimension_numbers<[1], [0], [0], [1], [0, 0, 1, 1], [], []>} : vector<16x32xf32>, vector<32x128xf32>, vector<16x128xf32> -> vector<16x128xf32>
    %117 = vector.broadcast %9 : vector<1x128xf32> to vector<16x128xf32>
    %118 = arith.addf %116, %117 : vector<16x128xf32>
    %cst_43 = arith.constant 0.000000e+00 : f32
    %119 = vector.broadcast %cst_43 : f32 to vector<16x128xf32>
    %120 = arith.maximumf %118, %119 : vector<16x128xf32>
    %c0_44 = arith.constant 0 : index
    %c0_45 = arith.constant 0 : index
    %121 = vector.load %arg3[%c0_44, %c0_45] : memref<128x32xf32, #tpu.memory_space<vmem>>, vector<128x32xf32>
    %cst_46 = arith.constant dense<0.000000e+00> : vector<16x32xf32>
    %122 = tpu.matmul %120, %121, %cst_46 {dimension_numbers = #tpu.dot_dimension_numbers<[1], [0], [0], [1], [0, 0, 1, 1], [], []>} : vector<16x128xf32>, vector<128x32xf32>, vector<16x32xf32> -> vector<16x32xf32>
    %123 = vector.broadcast %10 : vector<1x32xf32> to vector<16x32xf32>
    %124 = arith.addf %122, %123 : vector<16x32xf32>
    %125 = arith.addf %92, %124 : vector<16x32xf32>
    %c0_47 = arith.constant 0 : index
    %c0_48 = arith.constant 0 : index
    %126 = vector.load %arg5[%c0_47, %c0_48] : memref<16x32xf32, #tpu.memory_space<vmem>>, vector<16x32xf32>
    tpu.vector_store %arg5[%c0_47, %c0_48], %125 {strides = array<i32>} : memref<16x32xf32, #tpu.memory_space<vmem>>, vector<16x32xf32>,
    return
  }
}

</mosaic_0001>

<llo_original>
// kernel: decoder_layer_forward.1
$region0: #{decoder_layer_forward.1}
  #allocation0 [shape = 'u32[]', space=smem, size = 0x4, offset = 0x4, fixed_abs, tag = 'smem constant byte address 0x4 - core index']
  #allocation1 [shape = 'u32[144,128]{1,0:T(1,128)}', space=vmem, size = 0x12000, scoped, tag = 'internal scratch']
  %s0 = inlined_call_operand.vmem [shape: f32[16,32], index: 0, kind: input, shape index: {}]
  %s1 = inlined_call_operand.vmem [shape: f32[32,128], index: 1, kind: input, shape index: {}]
  %s2 = inlined_call_operand.vmem [shape: f32[32,128], index: 2, kind: input, shape index: {}]
  %s3 = inlined_call_operand.vmem [shape: f32[128,32], index: 3, kind: input, shape index: {}]
  %s4 = inlined_call_operand.vmem [shape: f32[10,128], index: 4, kind: input, shape index: {}]
  %s5 = inlined_call_operand.hbm [shape: f32[16,32], index: 5, kind: output, shape index: {}]
  %s6 = sld [smem:[#allocation0]]
  $region30: #{decoder_layer_forward.1} parent=0
    _
  %s8 = ssub.s32 1, %s6
  %s9 = scalar_select 0, %s8, %s6
  $region1: #{decoder_layer_forward.1} parent=0
    #allocation2 [shape = 'u8[8192]{0}', space=vmem, size = 0x2000, scoped, tag = 'output window, operand 0, single buffered']
    #allocation3 [shape = 's32[1]{0}', space=sflag, size = 0x4, scoped, tag = 'scoped memory for decoder_layer_forward.1']
    %10 = vsyncpa [#allocation3], 0
    // Predicated region
    $region2: #{decoder_layer_forward.1} parent=1 // pred_check
      _
    $region3: #{decoder_layer_forward.1} parent=1 // pred_check_branch
      %12 = sbr.rel (0) target = $region5
    $region4: #{decoder_layer_forward.1} parent=1 // pred_region
      _
    $region5: #{decoder_layer_forward.1} parent=1 // pred_fallthru
      _
    // Predicated region
    $region6: #{decoder_layer_forward.1} parent=1 // pred_check
      _
    $region7: #{decoder_layer_forward.1} parent=1 // pred_check_branch
      %14 = sbr.rel (0) target = $region9
    $region8: #{decoder_layer_forward.1} parent=1 // pred_region
      _
    $region9: #{decoder_layer_forward.1} parent=1 // pred_fallthru
      _
    // Predicated region
    $region10: #{decoder_layer_forward.1} parent=1 // pred_check
      _
    $region11: #{decoder_layer_forward.1} parent=1 // pred_check_branch
      %16 = sbr.rel (0) target = $region13
    $region12: #{decoder_layer_forward.1} parent=1 // pred_region
      _
    $region13: #{decoder_layer_forward.1} parent=1 // pred_fallthru
      _
    // Predicated region
    $region14: #{decoder_layer_forward.1} parent=1 // pred_check
      _
    $region15: #{decoder_layer_forward.1} parent=1 // pred_check_branch
      %18 = sbr.rel (0) target = $region17
    $region16: #{decoder_layer_forward.1} parent=1 // pred_region
      _
    $region17: #{decoder_layer_forward.1} parent=1 // pred_fallthru
      _
    // Predicated region
    $region18: #{decoder_layer_forward.1} parent=1 // pred_check
      _
    $region19: #{decoder_layer_forward.1} parent=1 // pred_check_branch
      %20 = sbr.rel (0) target = $region21
    $region20: #{decoder_layer_forward.1} parent=1 // pred_region
      _
    $region21: #{decoder_layer_forward.1} parent=1 // pred_fallthru
      _
    %v21 = vld [vmem:[%s0] sm:$0xff]
    %v22 = vld [vmem:[%s0 + $0x8] sm:$0xff]
    %v23 = vld [vmem:[%s4] sm:$0x1]
    %v24 = vld [vmem:[%s4 + $0x1] sm:$0x1]
    %v25 = vld [vmem:[%s4 + $0x2] sm:$0x1]
    %v26 = vld [vmem:[%s4 + $0x3] sm:$0x1]
    %v27 = vld [vmem:[%s4 + $0x4] sm:$0x1]
    %v28 = vld [vmem:[%s4 + $0x5] sm:$0x1]
    %v29 = vld [vmem:[%s4 + $0x6] sm:$0x1]
    %v30 = vld [vmem:[%s4 + $0x7] sm:$0x1]
    %v31 = vld [vmem:[%s4 + $0x8] sm:$0x1]
    %v32 = vld [vmem:[%s4 + $0x9] sm:$0x1]
    %vm33 = vcmask 261120
    %v34 = vsel %vm33, %v21, 0.0
    %35 = vadd.xlane.f32.xlu0 %v34
    %v36 = vpop.xlane.xlu0 %35
    %v37 = vsel %vm33, %v22, 0.0
    %38 = vadd.xlane.f32.xlu0 %v37
    %v39 = vpop.xlane.xlu0 %38
    %v40 = vrcp.pop 32.0
    %v41 = vmul.f32 %v36, %v40
    %v42 = vmul.f32 %v39, %v40
    %v43 = vsub.f32 %v21, %v41
    %v44 = vsub.f32 %v22, %v42
    %v45 = vmul.f32 %v43, %v43
    %v46 = vmul.f32 %v44, %v44
    %v47 = vsel %vm33, %v45, 0.0
    %48 = vadd.xlane.f32.xlu0 %v47
    %v49 = vpop.xlane.xlu0 %48
    %v50 = vsel %vm33, %v46, 0.0
    %51 = vadd.xlane.f32.xlu0 %v50
    %v52 = vpop.xlane.xlu0 %51
    %v53 = vmul.f32 %v49, %v40
    %v54 = vmul.f32 %v52, %v40
    %v55 = vadd.f32 %v53, 1e-05
    %v56 = vadd.f32 %v54, 1e-05
    %v57 = vrsqrt.pop %v55
    %v58 = vrsqrt.pop %v56
    %v59 = vmul.f32 %v43, %v57
    %v60 = vmul.f32 %v44, %v58
    %v61 = vlaneseq
    %v62 = vshrl.u32 %v61, 7
    %v63 = vsub.s32 0, %v62
    %v64 = vrot.slane %v23, %v63
    %v65 = vmul.f32 %v59, %v64
    %v66 = vmul.f32 %v60, %v64
    %v67 = vlaneseq
    %v68 = vshrl.u32 %v67, 7
    %v69 = vsub.s32 0, %v68
    %v70 = vrot.slane %v24, %v69
    %v71 = vadd.f32 %v65, %v70
    %v72 = vadd.f32 %v66, %v70
    %v73 = vld [vmem:[%s1] sm:$0xff]
    %v74 = vld [vmem:[%s1 + $0x8] sm:$0xff]
    %v75 = vld [vmem:[%s1 + $0x10] sm:$0xff]
    %v76 = vld [vmem:[%s1 + $0x18] sm:$0xff]
    %v77 = vlaneseq
    %v78 = vshrl.u32 %v77, 7
    %v79 = vsub.s32 0, %v78
    %v80 = vrot.slane %v25, %v79
    %v82 = vsel %vm33, %v71, 0
    %v85 = vsel %vm33, %v72, 0
    %87 = vmatprep.subr.mxu0 0.0
    %88 = vmatpush1.msra.mxu0 %v73
    %89 = vmatprep.subr.mxu0 0.0
    %90 = vmatpush1.msra.mxu0 %v74
    %91 = vmatprep.subr.mxu0 0.0
    %92 = vmatpush1.msra.mxu0 %v75
    %93 = vmatprep.subr.mxu0 0.0
    %94 = vmatpush1.msra.mxu0 %v76
    %95 = vmatprep.subr.mxu0 0.0
    %96 = vmatpush1.msra.mxu0 0.0
    %97 = vmatprep.subr.mxu0 0.0
    %98 = vmatpush1.msra.mxu0 0.0
    %99 = vmatprep.subr.mxu0 0.0
    %100 = vmatpush1.msra.mxu0 0.0
    %101 = vmatprep.subr.mxu0 0.0
    %102 = vmatpush1.msra.mxu0 0.0
    %103 = vmatprep.subr.mxu0 0.0
    %104 = vmatpush1.msra.mxu0 0.0
    %105 = vmatprep.subr.mxu0 0.0
    %106 = vmatpush1.msra.mxu0 0.0
    %107 = vmatprep.subr.mxu0 0.0
    %108 = vmatpush1.msra.mxu0 0.0
    %109 = vmatprep.subr.mxu0 0.0
    %110 = vmatpush1.msra.mxu0 0.0
    %111 = vmatprep.subr.mxu0 0.0
    %112 = vmatpush1.msra.mxu0 0.0
    %113 = vmatprep.subr.mxu0 0.0
    %114 = vmatpush1.msra.mxu0 0.0
    %115 = vmatprep.subr.mxu0 0.0
    %116 = vmatpush1.msra.mxu0 0.0
    %117 = vmatprep.subr.mxu0 0.0
    %118 = vmatpush1.msra.mxu0 0.0
    %119 = vmatprep.subr.mxu0 0.0
    %120 = vmatpush1.msra.mxu0 0.0
    %121 = vmatprep.subr.mxu0 0.0
    %122 = vmatpush1.msra.mxu0 0.0
    %123 = vmatprep.subr.mxu0 0.0
    %124 = vmatpush1.msra.mxu0 0.0
    %125 = vmatprep.subr.mxu0 0.0
    %126 = vmatpush1.msra.mxu0 0.0
    %127 = vmatprep.subr.mxu0 0.0
    %128 = vmatpush1.msra.mxu0 0.0
    %129 = vmatprep.subr.mxu0 0.0
    %130 = vmatpush1.msra.mxu0 0.0
    %131 = vmatprep.subr.mxu0 0.0
    %132 = vmatpush1.msra.mxu0 0.0
    %133 = vmatprep.subr.mxu0 0.0
    %134 = vmatpush1.msra.mxu0 0.0
    %135 = vmatprep.subr.mxu0 0.0
    %136 = vmatpush1.msra.mxu0 0.0
    %137 = vmatprep.subr.mxu0 0.0
    %138 = vmatpush1.msra.mxu0 0.0
    %139 = vmatprep.subr.mxu0 0.0
    %140 = vmatpush1.msra.mxu0 0.0
    %141 = vmatprep.subr.mxu0 0.0
    %142 = vmatpush1.msra.mxu0 0.0
    %143 = vmatprep.subr.mxu0 0.0
    %144 = vmatpush1.msra.mxu0 0.0
    %145 = vmatprep.subr.mxu0 0.0
    %146 = vmatpush1.msra.mxu0 0.0
    %147 = vmatprep.subr.mxu0 0.0
    %148 = vmatpush1.msra.mxu0 0.0
    %149 = vmatprep.subr.mxu0 0.0
    %150 = vmatpush1.msra.mxu0 0.0
    %151 = vmatprep.mubr.f32.mxu0 0.0
    %152 = vmatmul.mubr.f32.gmra.mrb[0].mxu0 %v82
    %v153 = vpop.f32.mrb[0].mxu0
    %v154 = vadd.f32 %v80, %v153
    %v155 = vpop.f32.mrb[0].mxu0
    %156 = vmatprep.mubr.f32.mxu0 0.0
    %157 = vmatmul.mubr.f32.gmra.mrb[0].mxu0 %v85
    %v158 = vpop.f32.mrb[0].mxu0
    %v159 = vadd.f32 %v80, %v158
    %v160 = vpop.f32.mrb[0].mxu0
    %161 = vdwg.mxu0
    %v162 = vlaneseq
    %v163 = vshrl.u32 %v162, 7
    %v164 = vsub.s32 0, %v163
    %v165 = vrot.slane %v26, %v164
    %170 = vrot.lane.b32.xlu0 %v73, 96
    %v171 = vpop.permute.xlu0 %170
    %172 = vrot.lane.b32.xlu0 %v74, 96
    %v173 = vpop.permute.xlu0 %172
    %174 = vrot.lane.b32.xlu0 %v75, 96
    %v175 = vpop.permute.xlu0 %174
    %176 = vrot.lane.b32.xlu0 %v76, 96
    %v177 = vpop.permute.xlu0 %176
    %182 = vmatprep.subr.mxu0 0.0
    %183 = vmatpush1.msra.mxu0 %v171
    %184 = vmatprep.subr.mxu0 0.0
    %185 = vmatpush1.msra.mxu0 %v173
    %186 = vmatprep.subr.mxu0 0.0
    %187 = vmatpush1.msra.mxu0 %v175
    %188 = vmatprep.subr.mxu0 0.0
    %189 = vmatpush1.msra.mxu0 %v177
    %190 = vmatprep.subr.mxu0 0.0
    %191 = vmatpush1.msra.mxu0 0.0
    %192 = vmatprep.subr.mxu0 0.0
    %193 = vmatpush1.msra.mxu0 0.0
    %194 = vmatprep.subr.mxu0 0.0
    %195 = vmatpush1.msra.mxu0 0.0
    %196 = vmatprep.subr.mxu0 0.0
    %197 = vmatpush1.msra.mxu0 0.0
    %198 = vmatprep.subr.mxu0 0.0
    %199 = vmatpush1.msra.mxu0 0.0
    %200 = vmatprep.subr.mxu0 0.0
    %201 = vmatpush1.msra.mxu0 0.0
    %202 = vmatprep.subr.mxu0 0.0
    %203 = vmatpush1.msra.mxu0 0.0
    %204 = vmatprep.subr.mxu0 0.0
    %205 = vmatpush1.msra.mxu0 0.0
    %206 = vmatprep.subr.mxu0 0.0
    %207 = vmatpush1.msra.mxu0 0.0
    %208 = vmatprep.subr.mxu0 0.0
    %209 = vmatpush1.msra.mxu0 0.0
    %210 = vmatprep.subr.mxu0 0.0
    %211 = vmatpush1.msra.mxu0 0.0
    %212 = vmatprep.subr.mxu0 0.0
    %213 = vmatpush1.msra.mxu0 0.0
    %214 = vmatprep.subr.mxu0 0.0
    %215 = vmatpush1.msra.mxu0 0.0
    %216 = vmatprep.subr.mxu0 0.0
    %217 = vmatpush1.msra.mxu0 0.0
    %218 = vmatprep.subr.mxu0 0.0
    %219 = vmatpush1.msra.mxu0 0.0
    %220 = vmatprep.subr.mxu0 0.0
    %221 = vmatpush1.msra.mxu0 0.0
    %222 = vmatprep.subr.mxu0 0.0
    %223 = vmatpush1.msra.mxu0 0.0
    %224 = vmatprep.subr.mxu0 0.0
    %225 = vmatpush1.msra.mxu0 0.0
    %226 = vmatprep.subr.mxu0 0.0
    %227 = vmatpush1.msra.mxu0 0.0
    %228 = vmatprep.subr.mxu0 0.0
    %229 = vmatpush1.msra.mxu0 0.0
    %230 = vmatprep.subr.mxu0 0.0
    %231 = vmatpush1.msra.mxu0 0.0
    %232 = vmatprep.subr.mxu0 0.0
    %233 = vmatpush1.msra.mxu0 0.0
    %234 = vmatprep.subr.mxu0 0.0
    %235 = vmatpush1.msra.mxu0 0.0
    %236 = vmatprep.subr.mxu0 0.0
    %237 = vmatpush1.msra.mxu0 0.0
    %238 = vmatprep.subr.mxu0 0.0
    %239 = vmatpush1.msra.mxu0 0.0
    %240 = vmatprep.subr.mxu0 0.0
    %241 = vmatpush1.msra.mxu0 0.0
    %242 = vmatprep.subr.mxu0 0.0
    %243 = vmatpush1.msra.mxu0 0.0
    %244 = vmatprep.subr.mxu0 0.0
    %245 = vmatpush1.msra.mxu0 0.0
    %246 = vmatprep.mubr.f32.mxu0 0.0
    %247 = vmatmul.mubr.f32.gmra.mrb[0].mxu0 %v82
    %v248 = vpop.f32.mrb[0].mxu0
    %v249 = vadd.f32 %v165, %v248
    %v250 = vpop.f32.mrb[0].mxu0
    %251 = vmatprep.mubr.f32.mxu0 0.0
    %252 = vmatmul.mubr.f32.gmra.mrb[0].mxu0 %v85
    %v253 = vpop.f32.mrb[0].mxu0
    %v254 = vadd.f32 %v165, %v253
    %v255 = vpop.f32.mrb[0].mxu0
    %256 = vdwg.mxu0
    %v257 = vlaneseq
    %v258 = vshrl.u32 %v257, 7
    %v259 = vsub.s32 0, %v258
    %v260 = vrot.slane %v27, %v259
    %261 = vrot.lane.b32.xlu0 %v73, 64
    %v262 = vpop.permute.xlu0 %261
    %263 = vrot.lane.b32.xlu0 %v74, 64
    %v264 = vpop.permute.xlu0 %263
    %265 = vrot.lane.b32.xlu0 %v75, 64
    %v266 = vpop.permute.xlu0 %265
    %267 = vrot.lane.b32.xlu0 %v76, 64
    %v268 = vpop.permute.xlu0 %267
    %273 = vmatprep.subr.mxu0 0.0
    %274 = vmatpush1.msra.mxu0 %v262
    %275 = vmatprep.subr.mxu0 0.0
    %276 = vmatpush1.msra.mxu0 %v264
    %277 = vmatprep.subr.mxu0 0.0
    %278 = vmatpush1.msra.mxu0 %v266
    %279 = vmatprep.subr.mxu0 0.0
    %280 = vmatpush1.msra.mxu0 %v268
    %281 = vmatprep.subr.mxu0 0.0
    %282 = vmatpush1.msra.mxu0 0.0
    %283 = vmatprep.subr.mxu0 0.0
    %284 = vmatpush1.msra.mxu0 0.0
    %285 = vmatprep.subr.mxu0 0.0
    %286 = vmatpush1.msra.mxu0 0.0
    %287 = vmatprep.subr.mxu0 0.0
    %288 = vmatpush1.msra.mxu0 0.0
    %289 = vmatprep.subr.mxu0 0.0
    %290 = vmatpush1.msra.mxu0 0.0
    %291 = vmatprep.subr.mxu0 0.0
    %292 = vmatpush1.msra.mxu0 0.0
    %293 = vmatprep.subr.mxu0 0.0
    %294 = vmatpush1.msra.mxu0 0.0
    %295 = vmatprep.subr.mxu0 0.0
    %296 = vmatpush1.msra.mxu0 0.0
    %297 = vmatprep.subr.mxu0 0.0
    %298 = vmatpush1.msra.mxu0 0.0
    %299 = vmatprep.subr.mxu0 0.0
    %300 = vmatpush1.msra.mxu0 0.0
    %301 = vmatprep.subr.mxu0 0.0
    %302 = vmatpush1.msra.mxu0 0.0
    %303 = vmatprep.subr.mxu0 0.0
    %304 = vmatpush1.msra.mxu0 0.0
    %305 = vmatprep.subr.mxu0 0.0
    %306 = vmatpush1.msra.mxu0 0.0
    %307 = vmatprep.subr.mxu0 0.0
    %308 = vmatpush1.msra.mxu0 0.0
    %309 = vmatprep.subr.mxu0 0.0
    %310 = vmatpush1.msra.mxu0 0.0
    %311 = vmatprep.subr.mxu0 0.0
    %312 = vmatpush1.msra.mxu0 0.0
    %313 = vmatprep.subr.mxu0 0.0
    %314 = vmatpush1.msra.mxu0 0.0
    %315 = vmatprep.subr.mxu0 0.0
    %316 = vmatpush1.msra.mxu0 0.0
    %317 = vmatprep.subr.mxu0 0.0
    %318 = vmatpush1.msra.mxu0 0.0
    %319 = vmatprep.subr.mxu0 0.0
    %320 = vmatpush1.msra.mxu0 0.0
    %321 = vmatprep.subr.mxu0 0.0
    %322 = vmatpush1.msra.mxu0 0.0
    %323 = vmatprep.subr.mxu0 0.0
    %324 = vmatpush1.msra.mxu0 0.0
    %325 = vmatprep.subr.mxu0 0.0
    %326 = vmatpush1.msra.mxu0 0.0
    %327 = vmatprep.subr.mxu0 0.0
    %328 = vmatpush1.msra.mxu0 0.0
    %329 = vmatprep.subr.mxu0 0.0
    %330 = vmatpush1.msra.mxu0 0.0
    %331 = vmatprep.subr.mxu0 0.0
    %332 = vmatpush1.msra.mxu0 0.0
    %333 = vmatprep.subr.mxu0 0.0
    %334 = vmatpush1.msra.mxu0 0.0
    %335 = vmatprep.subr.mxu0 0.0
    %336 = vmatpush1.msra.mxu0 0.0
    %337 = vmatprep.mubr.f32.mxu0 0.0
    %338 = vmatmul.mubr.f32.gmra.mrb[0].mxu0 %v82
    %v339 = vpop.f32.mrb[0].mxu0
    %v340 = vadd.f32 %v260, %v339
    %v341 = vpop.f32.mrb[0].mxu0
    %342 = vmatprep.mubr.f32.mxu0 0.0
    %343 = vmatmul.mubr.f32.gmra.mrb[0].mxu0 %v85
    %v344 = vpop.f32.mrb[0].mxu0
    %v345 = vadd.f32 %v260, %v344
    %v346 = vpop.f32.mrb[0].mxu0
    %347 = vdwg.mxu0
    %v348 = vmul.f32 %v154, 0.35355338
    %v349 = vmul.f32 %v159, 0.35355338
    %v350 = vlaneseq
    %v351 = vshrl.u32 %v350, 7
    %v352 = vadd.s32 %v351, 8
    %v353 = vlaneseq
    %v354 = vand.u32 %v353, 127
    %v355 = vshra.s32 %v351, 1
    %v356 = vshra.s32 %v352, 1
    %v357 = vand.u32 %v351, 1
    %v358 = vand.u32 %v352, 1
    %v359 = vand.u32 %v354, 15
    %v360 = vshra.s32 %v359, 1
    %v361 = vand.u32 %v359, 1
    %vm362 = vcmp.eq.s32.totalorder %v357, %v361
    %vm363 = vcmp.eq.s32.totalorder %v358, %v361
    %vm364 = vcmp.le.s32.totalorder %v360, %v355
    %vm365 = vcmp.le.s32.totalorder %v360, %v356
    %vm366 = vmand %vm362, %vm364
    %vm367 = vmand %vm363, %vm365
    %v368 = vsel %vm366, 0.0, -1e+09
    %v369 = vsel %vm367, 0.0, -1e+09
    %v370 = vadd.s32 %v351, 16
    %v371 = vadd.s32 %v351, 24
    %v372 = vadd.s32 %v351, 32
    %v373 = vadd.s32 %v351, 40
    %v374 = vadd.s32 %v351, 48
    %v375 = vadd.s32 %v351, 56
    %v376 = vshra.s32 %v351, 4
    %v377 = vshra.s32 %v352, 4
    %v378 = vshra.s32 %v370, 4
    %v379 = vshra.s32 %v371, 4
    %v380 = vshra.s32 %v372, 4
    %v381 = vshra.s32 %v373, 4
    %v382 = vshra.s32 %v374, 4
    %v383 = vshra.s32 %v375, 4
    %v384 = vshra.s32 %v354, 3
    %vm385 = vcmp.eq.s32.totalorder %v376, %v384
    %vm386 = vcmp.eq.s32.totalorder %v377, %v384
    %vm387 = vcmp.eq.s32.totalorder %v378, %v384
    %vm388 = vcmp.eq.s32.totalorder %v379, %v384
    %vm389 = vcmp.eq.s32.totalorder %v380, %v384
    %vm390 = vcmp.eq.s32.totalorder %v381, %v384
    %vm391 = vcmp.eq.s32.totalorder %v382, %v384
    %vm392 = vcmp.eq.s32.totalorder %v383, %v384
    %v393 = vsel %vm385, 1, 0
    %v394 = vsel %vm386, 1, 0
    %v395 = vsel %vm387, 1, 0
    %v396 = vsel %vm388, 1, 0
    %v397 = vsel %vm389, 1, 0
    %v398 = vsel %vm390, 1, 0
    %v399 = vsel %vm391, 1, 0
    %v400 = vsel %vm392, 1, 0
    %v401 = vcvt.s32.f32 %v393
    %v402 = vcvt.s32.f32 %v394
    %v403 = vcvt.s32.f32 %v395
    %v404 = vcvt.s32.f32 %v396
    %v405 = vcvt.s32.f32 %v397
    %v406 = vcvt.s32.f32 %v398
    %v407 = vcvt.s32.f32 %v399
    %v408 = vcvt.s32.f32 %v400
    %v409 = vmul.f32 %v249, %v401
    %v410 = vmul.f32 %v254, %v402
    %v411 = vmul.f32 %v249, %v403
    %v412 = vmul.f32 %v254, %v404
    %v413 = vmul.f32 %v249, %v405
    %v414 = vmul.f32 %v254, %v406
    %v415 = vmul.f32 %v249, %v407
    %v416 = vmul.f32 %v254, %v408
    %v417 = vmul.f32 %v340, %v401
    %v418 = vmul.f32 %v345, %v402
    %v419 = vmul.f32 %v340, %v403
    %v420 = vmul.f32 %v345, %v404
    %v421 = vmul.f32 %v340, %v405
    %v422 = vmul.f32 %v345, %v406
    %v423 = vmul.f32 %v340, %v407
    %v424 = vmul.f32 %v345, %v408
    %v426 = vsel %vm33, %v348, 0
    %v429 = vsel %vm33, %v349, 0
    %v432 = vsel %vm33, %v409, 0
    %v435 = vsel %vm33, %v410, 0
    %v438 = vsel %vm33, %v411, 0
    %v441 = vsel %vm33, %v412, 0
    %v444 = vsel %vm33, %v413, 0
    %v447 = vsel %vm33, %v414, 0
    %v450 = vsel %vm33, %v415, 0
    %v453 = vsel %vm33, %v416, 0
    %455 = vmatprep.subr.mxu0 0.0
    %456 = vmatpush1.xpose.msra.mxu0 %v432
    %457 = vmatprep.subr.mxu0 0.0
    %458 = vmatpush1.xpose.msra.mxu0 %v435
    %459 = vmatprep.subr.mxu0 0.0
    %460 = vmatpush1.xpose.msra.mxu0 %v438
    %461 = vmatprep.subr.mxu0 0.0
    %462 = vmatpush1.xpose.msra.mxu0 %v441
    %463 = vmatprep.subr.mxu0 0.0
    %464 = vmatpush1.xpose.msra.mxu0 %v444
    %465 = vmatprep.subr.mxu0 0.0
    %466 = vmatpush1.xpose.msra.mxu0 %v447
    %467 = vmatprep.subr.mxu0 0.0
    %468 = vmatpush1.xpose.msra.mxu0 %v450
    %469 = vmatprep.subr.mxu0 0.0
    %470 = vmatpush1.xpose.msra.mxu0 %v453
    %471 = vmatprep.subr.mxu0 0.0
    %472 = vmatpush1.xpose.msra.mxu0 0.0
    %473 = vmatprep.subr.mxu0 0.0
    %474 = vmatpush1.xpose.msra.mxu0 0.0
    %475 = vmatprep.subr.mxu0 0.0
    %476 = vmatpush1.xpose.msra.mxu0 0.0
    %477 = vmatprep.subr.mxu0 0.0
    %478 = vmatpush1.xpose.msra.mxu0 0.0
    %479 = vmatprep.subr.mxu0 0.0
    %480 = vmatpush1.xpose.msra.mxu0 0.0
    %481 = vmatprep.subr.mxu0 0.0
    %482 = vmatpush1.xpose.msra.mxu0 0.0
    %483 = vmatprep.subr.mxu0 0.0
    %484 = vmatpush1.xpose.msra.mxu0 0.0
    %485 = vmatprep.subr.mxu0 0.0
    %486 = vmatpush1.xpose.msra.mxu0 0.0
    %487 = vmatprep.subr.mxu0 0.0
    %488 = vmatpush1.xpose.msra.mxu0 0.0
    %489 = vmatprep.subr.mxu0 0.0
    %490 = vmatpush1.xpose.msra.mxu0 0.0
    %491 = vmatprep.subr.mxu0 0.0
    %492 = vmatpush1.xpose.msra.mxu0 0.0
    %493 = vmatprep.subr.mxu0 0.0
    %494 = vmatpush1.xpose.msra.mxu0 0.0
    %495 = vmatprep.subr.mxu0 0.0
    %496 = vmatpush1.xpose.msra.mxu0 0.0
    %497 = vmatprep.subr.mxu0 0.0
    %498 = vmatpush1.xpose.msra.mxu0 0.0
    %499 = vmatprep.subr.mxu0 0.0
    %500 = vmatpush1.xpose.msra.mxu0 0.0
    %501 = vmatprep.subr.mxu0 0.0
    %502 = vmatpush1.xpose.msra.mxu0 0.0
    %503 = vmatprep.subr.mxu0 0.0
    %504 = vmatpush1.xpose.msra.mxu0 0.0
    %505 = vmatprep.subr.mxu0 0.0
    %506 = vmatpush1.xpose.msra.mxu0 0.0
    %507 = vmatprep.subr.mxu0 0.0
    %508 = vmatpush1.xpose.msra.mxu0 0.0
    %509 = vmatprep.subr.mxu0 0.0
    %510 = vmatpush1.xpose.msra.mxu0 0.0
    %511 = vmatprep.subr.mxu0 0.0
    %512 = vmatpush1.xpose.msra.mxu0 0.0
    %513 = vmatprep.subr.mxu0 0.0
    %514 = vmatpush1.xpose.msra.mxu0 0.0
    %515 = vmatprep.subr.mxu0 0.0
    %516 = vmatpush1.xpose.msra.mxu0 0.0
    %517 = vmatprep.subr.mxu0 0.0
    %518 = vmatpush1.xpose.msra.mxu0 0.0
    %519 = vmatprep.mubr.f32.mxu0 0.0
    %520 = vmatmul.mubr.f32.gmra.mrb[0].mxu0 %v426
    %v521 = vpop.f32.mrb[0].mxu0
    %v522 = vadd.f32 %v368, %v521
    %v523 = vpop.f32.mrb[0].mxu0
    %524 = vmatprep.mubr.f32.mxu0 0.0
    %525 = vmatmul.mubr.f32.gmra.mrb[0].mxu0 %v429
    %v526 = vpop.f32.mrb[0].mxu0
    %v527 = vadd.f32 %v369, %v526
    %v528 = vpop.f32.mrb[0].mxu0
    %529 = vdwg.mxu0
    %vm530 = vcmask 523264
    %v531 = vsel %vm530, %v522, -inf
    %532 = vmax.xlane.f32.xlu0 %v531
    %v533 = vpop.xlane.xlu0 %532
    %v534 = vsel %vm530, %v527, -inf
    %535 = vmax.xlane.f32.xlu0 %v534
    %v536 = vpop.xlane.xlu0 %535
    %v537 = vsub.f32 %v522, %v533
    %v538 = vsub.f32 %v527, %v536
    %v539 = vmul.f32 %v537, 1.442695
    %v540 = vpow.pop %v539
    %v541 = vmul.f32 %v538, 1.442695
    %v542 = vpow.pop %v541
    %v544 = vsel %vm530, %v540, 0
    %v547 = vsel %vm530, %v542, 0
    %549 = vmatprep.subr.mxu0 0.0
    %550 = vmatpush1.msra.mxu0 %v401
    %551 = vmatprep.subr.mxu0 0.0
    %552 = vmatpush1.msra.mxu0 %v402
    %553 = vmatprep.subr.mxu0 0.0
    %554 = vmatpush1.msra.mxu0 %v403
    %555 = vmatprep.subr.mxu0 0.0
    %556 = vmatpush1.msra.mxu0 %v404
    %557 = vmatprep.subr.mxu0 0.0
    %558 = vmatpush1.msra.mxu0 %v405
    %559 = vmatprep.subr.mxu0 0.0
    %560 = vmatpush1.msra.mxu0 %v406
    %561 = vmatprep.subr.mxu0 0.0
    %562 = vmatpush1.msra.mxu0 %v407
    %563 = vmatprep.subr.mxu0 0.0
    %564 = vmatpush1.msra.mxu0 %v408
    %565 = vmatprep.subr.mxu0 0.0
    %566 = vmatpush1.msra.mxu0 0.0
    %567 = vmatprep.subr.mxu0 0.0
    %568 = vmatpush1.msra.mxu0 0.0
    %569 = vmatprep.subr.mxu0 0.0
    %570 = vmatpush1.msra.mxu0 0.0
    %571 = vmatprep.subr.mxu0 0.0
    %572 = vmatpush1.msra.mxu0 0.0
    %573 = vmatprep.subr.mxu0 0.0
    %574 = vmatpush1.msra.mxu0 0.0
    %575 = vmatprep.subr.mxu0 0.0
    %576 = vmatpush1.msra.mxu0 0.0
    %577 = vmatprep.subr.mxu0 0.0
    %578 = vmatpush1.msra.mxu0 0.0
    %579 = vmatprep.subr.mxu0 0.0
    %580 = vmatpush1.msra.mxu0 0.0
    %581 = vmatprep.subr.mxu0 0.0
    %582 = vmatpush1.msra.mxu0 0.0
    %583 = vmatprep.subr.mxu0 0.0
    %584 = vmatpush1.msra.mxu0 0.0
    %585 = vmatprep.subr.mxu0 0.0
    %586 = vmatpush1.msra.mxu0 0.0
    %587 = vmatprep.subr.mxu0 0.0
    %588 = vmatpush1.msra.mxu0 0.0
    %589 = vmatprep.subr.mxu0 0.0
    %590 = vmatpush1.msra.mxu0 0.0
    %591 = vmatprep.subr.mxu0 0.0
    %592 = vmatpush1.msra.mxu0 0.0
    %593 = vmatprep.subr.mxu0 0.0
    %594 = vmatpush1.msra.mxu0 0.0
    %595 = vmatprep.subr.mxu0 0.0
    %596 = vmatpush1.msra.mxu0 0.0
    %597 = vmatprep.subr.mxu0 0.0
    %598 = vmatpush1.msra.mxu0 0.0
    %599 = vmatprep.subr.mxu0 0.0
    %600 = vmatpush1.msra.mxu0 0.0
    %601 = vmatprep.subr.mxu0 0.0
    %602 = vmatpush1.msra.mxu0 0.0
    %603 = vmatprep.subr.mxu0 0.0
    %604 = vmatpush1.msra.mxu0 0.0
    %605 = vmatprep.subr.mxu0 0.0
    %606 = vmatpush1.msra.mxu0 0.0
    %607 = vmatprep.subr.mxu0 0.0
    %608 = vmatpush1.msra.mxu0 0.0
    %609 = vmatprep.subr.mxu0 0.0
    %610 = vmatpush1.msra.mxu0 0.0
    %611 = vmatprep.subr.mxu0 0.0
    %612 = vmatpush1.msra.mxu0 0.0
    %613 = vmatprep.mubr.f32.mxu0 0.0
    %614 = vmatmul.mubr.f32.gmra.mrb[0].mxu0 %v544
    %v615 = vpop.f32.mrb[0].mxu0
    %v616 = vadd.f32 0.0, %v615
    %v617 = vpop.f32.mrb[0].mxu0
    %618 = vmatprep.mubr.f32.mxu0 0.0
    %619 = vmatmul.mubr.f32.gmra.mrb[0].mxu0 %v547
    %v620 = vpop.f32.mrb[0].mxu0
    %v621 = vadd.f32 0.0, %v620
    %v622 = vpop.f32.mrb[0].mxu0
    %623 = vdwg.mxu0
    %624 = vmatprep.subr.mxu0 0.0
    %625 = vmatpush1.msra.mxu0 %v417
    %626 = vmatprep.subr.mxu0 0.0
    %627 = vmatpush1.msra.mxu0 %v418
    %628 = vmatprep.subr.mxu0 0.0
    %629 = vmatpush1.msra.mxu0 %v419
    %630 = vmatprep.subr.mxu0 0.0
    %631 = vmatpush1.msra.mxu0 %v420
    %632 = vmatprep.subr.mxu0 0.0
    %633 = vmatpush1.msra.mxu0 %v421
    %634 = vmatprep.subr.mxu0 0.0
    %635 = vmatpush1.msra.mxu0 %v422
    %636 = vmatprep.subr.mxu0 0.0
    %637 = vmatpush1.msra.mxu0 %v423
    %638 = vmatprep.subr.mxu0 0.0
    %639 = vmatpush1.msra.mxu0 %v424
    %640 = vmatprep.subr.mxu0 0.0
    %641 = vmatpush1.msra.mxu0 0.0
    %642 = vmatprep.subr.mxu0 0.0
    %643 = vmatpush1.msra.mxu0 0.0
    %644 = vmatprep.subr.mxu0 0.0
    %645 = vmatpush1.msra.mxu0 0.0
    %646 = vmatprep.subr.mxu0 0.0
    %647 = vmatpush1.msra.mxu0 0.0
    %648 = vmatprep.subr.mxu0 0.0
    %649 = vmatpush1.msra.mxu0 0.0
    %650 = vmatprep.subr.mxu0 0.0
    %651 = vmatpush1.msra.mxu0 0.0
    %652 = vmatprep.subr.mxu0 0.0
    %653 = vmatpush1.msra.mxu0 0.0
    %654 = vmatprep.subr.mxu0 0.0
    %655 = vmatpush1.msra.mxu0 0.0
    %656 = vmatprep.subr.mxu0 0.0
    %657 = vmatpush1.msra.mxu0 0.0
    %658 = vmatprep.subr.mxu0 0.0
    %659 = vmatpush1.msra.mxu0 0.0
    %660 = vmatprep.subr.mxu0 0.0
    %661 = vmatpush1.msra.mxu0 0.0
    %662 = vmatprep.subr.mxu0 0.0
    %663 = vmatpush1.msra.mxu0 0.0
    %664 = vmatprep.subr.mxu0 0.0
    %665 = vmatpush1.msra.mxu0 0.0
    %666 = vmatprep.subr.mxu0 0.0
    %667 = vmatpush1.msra.mxu0 0.0
    %668 = vmatprep.subr.mxu0 0.0
    %669 = vmatpush1.msra.mxu0 0.0
    %670 = vmatprep.subr.mxu0 0.0
    %671 = vmatpush1.msra.mxu0 0.0
    %672 = vmatprep.subr.mxu0 0.0
    %673 = vmatpush1.msra.mxu0 0.0
    %674 = vmatprep.subr.mxu0 0.0
    %675 = vmatpush1.msra.mxu0 0.0
    %676 = vmatprep.subr.mxu0 0.0
    %677 = vmatpush1.msra.mxu0 0.0
    %678 = vmatprep.subr.mxu0 0.0
    %679 = vmatpush1.msra.mxu0 0.0
    %680 = vmatprep.subr.mxu0 0.0
    %681 = vmatpush1.msra.mxu0 0.0
    %682 = vmatprep.subr.mxu0 0.0
    %683 = vmatpush1.msra.mxu0 0.0
    %684 = vmatprep.subr.mxu0 0.0
    %685 = vmatpush1.msra.mxu0 0.0
    %686 = vmatprep.subr.mxu0 0.0
    %687 = vmatpush1.msra.mxu0 0.0
    %688 = vmatprep.mubr.f32.mxu0 0.0
    %689 = vmatmul.mubr.f32.gmra.mrb[0].mxu0 %v544
    %v690 = vpop.f32.mrb[0].mxu0
    %v691 = vadd.f32 0.0, %v690
    %v692 = vpop.f32.mrb[0].mxu0
    %693 = vmatprep.mubr.f32.mxu0 0.0
    %694 = vmatmul.mubr.f32.gmra.mrb[0].mxu0 %v547
    %v695 = vpop.f32.mrb[0].mxu0
    %v696 = vadd.f32 0.0, %v695
    %v697 = vpop.f32.mrb[0].mxu0
    %698 = vdwg.mxu0
    %v699 = vrcp.pop %v616
    %v700 = vmul.f32 %v691, %v699
    %v701 = vrcp.pop %v621
    %v702 = vmul.f32 %v696, %v701
    %v703 = vlaneseq
    %v704 = vshrl.u32 %v703, 7
    %v705 = vsub.s32 0, %v704
    %v706 = vrot.slane %v28, %v705
    %707 = vrot.lane.b32.xlu0 %v73, 32
    %v708 = vpop.permute.xlu0 %707
    %709 = vrot.lane.b32.xlu0 %v74, 32
    %v710 = vpop.permute.xlu0 %709
    %711 = vrot.lane.b32.xlu0 %v75, 32
    %v712 = vpop.permute.xlu0 %711
    %713 = vrot.lane.b32.xlu0 %v76, 32
    %v714 = vpop.permute.xlu0 %713
    %v720 = vsel %vm33, %v700, 0
    %v723 = vsel %vm33, %v702, 0
    %725 = vmatprep.subr.mxu0 0.0
    %726 = vmatpush1.msra.mxu0 %v708
    %727 = vmatprep.subr.mxu0 0.0
    %728 = vmatpush1.msra.mxu0 %v710
    %729 = vmatprep.subr.mxu0 0.0
    %730 = vmatpush1.msra.mxu0 %v712
    %731 = vmatprep.subr.mxu0 0.0
    %732 = vmatpush1.msra.mxu0 %v714
    %733 = vmatprep.subr.mxu0 0.0
    %734 = vmatpush1.msra.mxu0 0.0
    %735 = vmatprep.subr.mxu0 0.0
    %736 = vmatpush1.msra.mxu0 0.0
    %737 = vmatprep.subr.mxu0 0.0
    %738 = vmatpush1.msra.mxu0 0.0
    %739 = vmatprep.subr.mxu0 0.0
    %740 = vmatpush1.msra.mxu0 0.0
    %741 = vmatprep.subr.mxu0 0.0
    %742 = vmatpush1.msra.mxu0 0.0
    %743 = vmatprep.subr.mxu0 0.0
    %744 = vmatpush1.msra.mxu0 0.0
    %745 = vmatprep.subr.mxu0 0.0
    %746 = vmatpush1.msra.mxu0 0.0
    %747 = vmatprep.subr.mxu0 0.0
    %748 = vmatpush1.msra.mxu0 0.0
    %749 = vmatprep.subr.mxu0 0.0
    %750 = vmatpush1.msra.mxu0 0.0
    %751 = vmatprep.subr.mxu0 0.0
    %752 = vmatpush1.msra.mxu0 0.0
    %753 = vmatprep.subr.mxu0 0.0
    %754 = vmatpush1.msra.mxu0 0.0
    %755 = vmatprep.subr.mxu0 0.0
    %756 = vmatpush1.msra.mxu0 0.0
    %757 = vmatprep.subr.mxu0 0.0
    %758 = vmatpush1.msra.mxu0 0.0
    %759 = vmatprep.subr.mxu0 0.0
    %760 = vmatpush1.msra.mxu0 0.0
    %761 = vmatprep.subr.mxu0 0.0
    %762 = vmatpush1.msra.mxu0 0.0
    %763 = vmatprep.subr.mxu0 0.0
    %764 = vmatpush1.msra.mxu0 0.0
    %765 = vmatprep.subr.mxu0 0.0
    %766 = vmatpush1.msra.mxu0 0.0
    %767 = vmatprep.subr.mxu0 0.0
    %768 = vmatpush1.msra.mxu0 0.0
    %769 = vmatprep.subr.mxu0 0.0
    %770 = vmatpush1.msra.mxu0 0.0
    %771 = vmatprep.subr.mxu0 0.0
    %772 = vmatpush1.msra.mxu0 0.0
    %773 = vmatprep.subr.mxu0 0.0
    %774 = vmatpush1.msra.mxu0 0.0
    %775 = vmatprep.subr.mxu0 0.0
    %776 = vmatpush1.msra.mxu0 0.0
    %777 = vmatprep.subr.mxu0 0.0
    %778 = vmatpush1.msra.mxu0 0.0
    %779 = vmatprep.subr.mxu0 0.0
    %780 = vmatpush1.msra.mxu0 0.0
    %781 = vmatprep.subr.mxu0 0.0
    %782 = vmatpush1.msra.mxu0 0.0
    %783 = vmatprep.subr.mxu0 0.0
    %784 = vmatpush1.msra.mxu0 0.0
    %785 = vmatprep.subr.mxu0 0.0
    %786 = vmatpush1.msra.mxu0 0.0
    %787 = vmatprep.subr.mxu0 0.0
    %788 = vmatpush1.msra.mxu0 0.0
    %789 = vmatprep.mubr.f32.mxu0 0.0
    %790 = vmatmul.mubr.f32.gmra.mrb[0].mxu0 %v720
    %v791 = vpop.f32.mrb[0].mxu0
    %v792 = vadd.f32 %v706, %v791
    %v793 = vpop.f32.mrb[0].mxu0
    %794 = vmatprep.mubr.f32.mxu0 0.0
    %795 = vmatmul.mubr.f32.gmra.mrb[0].mxu0 %v723
    %v796 = vpop.f32.mrb[0].mxu0
    %v797 = vadd.f32 %v706, %v796
    %v798 = vpop.f32.mrb[0].mxu0
    %799 = vdwg.mxu0
    %v800 = vadd.f32 %v792, %v21
    %v801 = vadd.f32 %v797, %v22
    %v802 = vsel %vm33, %v800, 0.0
    %803 = vadd.xlane.f32.xlu0 %v802
    %v804 = vpop.xlane.xlu0 %803
    %v805 = vsel %vm33, %v801, 0.0
    %806 = vadd.xlane.f32.xlu0 %v805
    %v807 = vpop.xlane.xlu0 %806
    %v808 = vmul.f32 %v804, %v40
    %v809 = vmul.f32 %v807, %v40
    %v810 = vsub.f32 %v800, %v808
    %v811 = vsub.f32 %v801, %v809
    %v812 = vmul.f32 %v810, %v810
    %v813 = vmul.f32 %v811, %v811
    %v814 = vsel %vm33, %v812, 0.0
    %815 = vadd.xlane.f32.xlu0 %v814
    %v816 = vpop.xlane.xlu0 %815
    %v817 = vsel %vm33, %v813, 0.0
    %818 = vadd.xlane.f32.xlu0 %v817
    %v819 = vpop.xlane.xlu0 %818
    %v820 = vmul.f32 %v816, %v40
    %v821 = vmul.f32 %v819, %v40
    %v822 = vadd.f32 %v820, 1e-05
    %v823 = vadd.f32 %v821, 1e-05
    %v824 = vrsqrt.pop %v822
    %v825 = vrsqrt.pop %v823
    %v826 = vmul.f32 %v810, %v824
    %v827 = vmul.f32 %v811, %v825
    %v828 = vlaneseq
    %v829 = vshrl.u32 %v828, 7
    %v830 = vsub.s32 0, %v829
    %v831 = vrot.slane %v29, %v830
    %v832 = vmul.f32 %v826, %v831
    %v833 = vmul.f32 %v827, %v831
    %v834 = vlaneseq
    %v835 = vshrl.u32 %v834, 7
    %v836 = vsub.s32 0, %v835
    %v837 = vrot.slane %v30, %v836
    %v838 = vadd.f32 %v832, %v837
    %v839 = vadd.f32 %v833, %v837
    %v840 = vld [vmem:[%s2] sm:$0xff]
    %v841 = vld [vmem:[%s2 + $0x8] sm:$0xff]
    %v842 = vld [vmem:[%s2 + $0x10] sm:$0xff]
    %v843 = vld [vmem:[%s2 + $0x18] sm:$0xff]
    %v844 = vlaneseq
    %v845 = vshrl.u32 %v844, 7
    %v846 = vsub.s32 0, %v845
    %v847 = vrot.slane %v31, %v846
    %v849 = vsel %vm33, %v838, 0
    %v852 = vsel %vm33, %v839, 0
    %854 = vmatprep.subr.mxu0 0.0
    %855 = vmatpush1.msra.mxu0 %v840
    %856 = vmatprep.subr.mxu0 0.0
    %857 = vmatpush1.msra.mxu0 %v841
    %858 = vmatprep.subr.mxu0 0.0
    %859 = vmatpush1.msra.mxu0 %v842
    %860 = vmatprep.subr.mxu0 0.0
    %861 = vmatpush1.msra.mxu0 %v843
    %862 = vmatprep.subr.mxu0 0.0
    %863 = vmatpush1.msra.mxu0 0.0
    %864 = vmatprep.subr.mxu0 0.0
    %865 = vmatpush1.msra.mxu0 0.0
    %866 = vmatprep.subr.mxu0 0.0
    %867 = vmatpush1.msra.mxu0 0.0
    %868 = vmatprep.subr.mxu0 0.0
    %869 = vmatpush1.msra.mxu0 0.0
    %870 = vmatprep.subr.mxu0 0.0
    %871 = vmatpush1.msra.mxu0 0.0
    %872 = vmatprep.subr.mxu0 0.0
    %873 = vmatpush1.msra.mxu0 0.0
    %874 = vmatprep.subr.mxu0 0.0
    %875 = vmatpush1.msra.mxu0 0.0
    %876 = vmatprep.subr.mxu0 0.0
    %877 = vmatpush1.msra.mxu0 0.0
    %878 = vmatprep.subr.mxu0 0.0
    %879 = vmatpush1.msra.mxu0 0.0
    %880 = vmatprep.subr.mxu0 0.0
    %881 = vmatpush1.msra.mxu0 0.0
    %882 = vmatprep.subr.mxu0 0.0
    %883 = vmatpush1.msra.mxu0 0.0
    %884 = vmatprep.subr.mxu0 0.0
    %885 = vmatpush1.msra.mxu0 0.0
    %886 = vmatprep.subr.mxu0 0.0
    %887 = vmatpush1.msra.mxu0 0.0
    %888 = vmatprep.subr.mxu0 0.0
    %889 = vmatpush1.msra.mxu0 0.0
    %890 = vmatprep.subr.mxu0 0.0
    %891 = vmatpush1.msra.mxu0 0.0
    %892 = vmatprep.subr.mxu0 0.0
    %893 = vmatpush1.msra.mxu0 0.0
    %894 = vmatprep.subr.mxu0 0.0
    %895 = vmatpush1.msra.mxu0 0.0
    %896 = vmatprep.subr.mxu0 0.0
    %897 = vmatpush1.msra.mxu0 0.0
    %898 = vmatprep.subr.mxu0 0.0
    %899 = vmatpush1.msra.mxu0 0.0
    %900 = vmatprep.subr.mxu0 0.0
    %901 = vmatpush1.msra.mxu0 0.0
    %902 = vmatprep.subr.mxu0 0.0
    %903 = vmatpush1.msra.mxu0 0.0
    %904 = vmatprep.subr.mxu0 0.0
    %905 = vmatpush1.msra.mxu0 0.0
    %906 = vmatprep.subr.mxu0 0.0
    %907 = vmatpush1.msra.mxu0 0.0
    %908 = vmatprep.subr.mxu0 0.0
    %909 = vmatpush1.msra.mxu0 0.0
    %910 = vmatprep.subr.mxu0 0.0
    %911 = vmatpush1.msra.mxu0 0.0
    %912 = vmatprep.subr.mxu0 0.0
    %913 = vmatpush1.msra.mxu0 0.0
    %914 = vmatprep.subr.mxu0 0.0
    %915 = vmatpush1.msra.mxu0 0.0
    %916 = vmatprep.subr.mxu0 0.0
    %917 = vmatpush1.msra.mxu0 0.0
    %918 = vmatprep.mubr.f32.mxu0 0.0
    %919 = vmatmul.mubr.f32.gmra.mrb[0].mxu0 %v849
    %v920 = vpop.f32.mrb[0].mxu0
    %v921 = vadd.f32 %v847, %v920
    %v922 = vpop.f32.mrb[0].mxu0
    %923 = vmatprep.mubr.f32.mxu0 0.0
    %924 = vmatmul.mubr.f32.gmra.mrb[0].mxu0 %v852
    %v925 = vpop.f32.mrb[0].mxu0
    %v926 = vadd.f32 %v847, %v925
    %v927 = vpop.f32.mrb[0].mxu0
    %928 = vdwg.mxu0
    %v929 = vmax.f32 %v921, 0.0
    %v930 = vmax.f32 %v926, 0.0
    %v931 = vld [vmem:[%s3] sm:$0xff]
    %v932 = vld [vmem:[%s3 + $0x8] sm:$0xff]
    %v933 = vld [vmem:[%s3 + $0x10] sm:$0xff]
    %v934 = vld [vmem:[%s3 + $0x18] sm:$0xff]
    %v935 = vld [vmem:[%s3 + $0x20] sm:$0xff]
    %v936 = vld [vmem:[%s3 + $0x28] sm:$0xff]
    %v937 = vld [vmem:[%s3 + $0x30] sm:$0xff]
    %v938 = vld [vmem:[%s3 + $0x38] sm:$0xff]
    %v939 = vld [vmem:[%s3 + $0x40] sm:$0xff]
    %v940 = vld [vmem:[%s3 + $0x48] sm:$0xff]
    %v941 = vld [vmem:[%s3 + $0x50] sm:$0xff]
    %v942 = vld [vmem:[%s3 + $0x58] sm:$0xff]
    %v943 = vld [vmem:[%s3 + $0x60] sm:$0xff]
    %v944 = vld [vmem:[%s3 + $0x68] sm:$0xff]
    %v945 = vld [vmem:[%s3 + $0x70] sm:$0xff]
    %v946 = vld [vmem:[%s3 + $0x78] sm:$0xff]
    %v947 = vlaneseq
    %v948 = vshrl.u32 %v947, 7
    %v949 = vsub.s32 0, %v948
    %v950 = vrot.slane %v32, %v949
    %951 = vmatprep.subr.mxu0 0.0
    %952 = vmatpush1.msra.mxu0 %v931
    %953 = vmatprep.subr.mxu0 0.0
    %954 = vmatpush1.msra.mxu0 %v932
    %955 = vmatprep.subr.mxu0 0.0
    %956 = vmatpush1.msra.mxu0 %v933
    %957 = vmatprep.subr.mxu0 0.0
    %958 = vmatpush1.msra.mxu0 %v934
    %959 = vmatprep.subr.mxu0 0.0
    %960 = vmatpush1.msra.mxu0 %v935
    %961 = vmatprep.subr.mxu0 0.0
    %962 = vmatpush1.msra.mxu0 %v936
    %963 = vmatprep.subr.mxu0 0.0
    %964 = vmatpush1.msra.mxu0 %v937
    %965 = vmatprep.subr.mxu0 0.0
    %966 = vmatpush1.msra.mxu0 %v938
    %967 = vmatprep.subr.mxu0 0.0
    %968 = vmatpush1.msra.mxu0 %v939
    %969 = vmatprep.subr.mxu0 0.0
    %970 = vmatpush1.msra.mxu0 %v940
    %971 = vmatprep.subr.mxu0 0.0
    %972 = vmatpush1.msra.mxu0 %v941
    %973 = vmatprep.subr.mxu0 0.0
    %974 = vmatpush1.msra.mxu0 %v942
    %975 = vmatprep.subr.mxu0 0.0
    %976 = vmatpush1.msra.mxu0 %v943
    %977 = vmatprep.subr.mxu0 0.0
    %978 = vmatpush1.msra.mxu0 %v944
    %979 = vmatprep.subr.mxu0 0.0
    %980 = vmatpush1.msra.mxu0 %v945
    %981 = vmatprep.subr.mxu0 0.0
    %982 = vmatpush1.msra.mxu0 %v946
    %983 = vmatprep.subr.mxu0 0.0
    %984 = vmatpush1.msra.mxu0 0.0
    %985 = vmatprep.subr.mxu0 0.0
    %986 = vmatpush1.msra.mxu0 0.0
    %987 = vmatprep.subr.mxu0 0.0
    %988 = vmatpush1.msra.mxu0 0.0
    %989 = vmatprep.subr.mxu0 0.0
    %990 = vmatpush1.msra.mxu0 0.0
    %991 = vmatprep.subr.mxu0 0.0
    %992 = vmatpush1.msra.mxu0 0.0
    %993 = vmatprep.subr.mxu0 0.0
    %994 = vmatpush1.msra.mxu0 0.0
    %995 = vmatprep.subr.mxu0 0.0
    %996 = vmatpush1.msra.mxu0 0.0
    %997 = vmatprep.subr.mxu0 0.0
    %998 = vmatpush1.msra.mxu0 0.0
    %999 = vmatprep.subr.mxu0 0.0
    %1000 = vmatpush1.msra.mxu0 0.0
    %1001 = vmatprep.subr.mxu0 0.0
    %1002 = vmatpush1.msra.mxu0 0.0
    %1003 = vmatprep.subr.mxu0 0.0
    %1004 = vmatpush1.msra.mxu0 0.0
    %1005 = vmatprep.subr.mxu0 0.0
    %1006 = vmatpush1.msra.mxu0 0.0
    %1007 = vmatprep.subr.mxu0 0.0
    %1008 = vmatpush1.msra.mxu0 0.0
    %1009 = vmatprep.subr.mxu0 0.0
    %1010 = vmatpush1.msra.mxu0 0.0
    %1011 = vmatprep.subr.mxu0 0.0
    %1012 = vmatpush1.msra.mxu0 0.0
    %1013 = vmatprep.subr.mxu0 0.0
    %1014 = vmatpush1.msra.mxu0 0.0
    %1015 = vmatprep.mubr.f32.mxu0 0.0
    %1016 = vmatmul.mubr.f32.gmra.mrb[0].mxu0 %v929
    %v1017 = vpop.f32.mrb[0].mxu0
    %v1018 = vadd.f32 %v950, %v1017
    %v1019 = vpop.f32.mrb[0].mxu0
    %1020 = vmatprep.mubr.f32.mxu0 0.0
    %1021 = vmatmul.mubr.f32.gmra.mrb[0].mxu0 %v930
    %v1022 = vpop.f32.mrb[0].mxu0
    %v1023 = vadd.f32 %v950, %v1022
    %v1024 = vpop.f32.mrb[0].mxu0
    %1025 = vdwg.mxu0
    %v1026 = vadd.f32 %v800, %v1018
    %v1027 = vadd.f32 %v801, %v1023
    %1028 = vst.msk [vmem:[#allocation2] sm:$0xff] %vm33, %v1026
    %1029 = vst.msk [vmem:[#allocation2 + $0x8] sm:$0xff] %vm33, %v1027
    // Predicated region
    $region22: #{decoder_layer_forward.1} parent=1 // pred_check
      _
    $region23: #{decoder_layer_forward.1} parent=1 // pred_check_branch
      %1031 = sbr.rel (0) target = $region25
    $region24: #{decoder_layer_forward.1} parent=1 // pred_region
      %s1033 = ssub.s32 256, 256
      %1034 = vsyncadd [#allocation3], %s1033
      %s1035 = sshll.u32 [#allocation2], 4
      %s1036 = int_to_ptr.vmem [resolvable:$true] %s1035
      %1041 = dma.vmem_to_hbm [thread:$0]  %s1036, 256, %s5, [#allocation3], 128, 128, 8
    $region25: #{decoder_layer_forward.1} parent=1 // pred_fallthru
      _
    // Predicated region
    $region26: #{decoder_layer_forward.1} parent=1 // pred_check
      _
    $region27: #{decoder_layer_forward.1} parent=1 // pred_check_branch
      %1043 = sbr.rel (0) target = $region29
    $region28: #{decoder_layer_forward.1} parent=1 // pred_region
      %1044 = dma.done [#allocation3], 256
    $region29: #{decoder_layer_forward.1} parent=1 // pred_fallthru
      _
    %1045 = vsyncpa [#allocation3], 1

</llo_original>
